<compile_context>
chip_gen: v5e
topology: v5e:2x2
jax: 0.10.0
libtpu: 0.0.40
codegen_flags: <defaults>
</compile_context>

<pallas_src>
import math

import jax
import jax.numpy as jnp
from jax.experimental import pallas as pl
from jax.experimental.pallas import tpu as pltpu


_SMALL_FALLBACK_BYTES = 128 * 1024   # below this, a fused XLA select wins
_TARGET_BLOCK_BYTES = 1 << 20        # ~1 MiB per stream per pipeline step


def _round_down(x, m):
    return (x // m) * m


def _make_select_kernel(idim, col_block, period):
    """out = where(col < idim, src, base) over a (tile_rows, col_block) tile."""
    def kernel(base_ref, src_ref, out_ref):
        # (1, col_block) column mask; static config -> compile-time constant,
        # broadcast over the row tile by jnp.where.
        col = jax.lax.broadcasted_iota(jnp.int32, (1, col_block), 1)
        if period is not None and period != col_block:
            col = col % period
        out_ref[...] = jnp.where(col < idim, src_ref[...], base_ref[...])
    return kernel


def _run_select(base2d, src2d, *, idim, col_block, period):
    """Streams only the first `col_block` columns of base/source/output; the
    remaining columns pass through untouched via the output<-base alias.
    src2d has either the same number of rows as base2d, or exactly 1 row."""
    n_rows, full_width = base2d.shape
    src_rows = src2d.shape[0]
    itemsize = jnp.dtype(base2d.dtype).itemsize

    # ---- block sizing: ~1 MiB per buffer, sublane-rounded, >=8 grid steps ---
    sub = max(8, 32 // itemsize)                 # packed sublane count
    per_row = col_block * itemsize
    tile_rows = max(sub, _round_down(_TARGET_BLOCK_BYTES // per_row, sub))
    if n_rows > 8 * sub:                         # v7x: shard rows over 2 TCs
        tile_rows = min(tile_rows, max(sub, _round_down(pl.cdiv(n_rows, 8), sub)))
    if tile_rows >= n_rows:
        tile_rows = n_rows                       # single block == full dim: legal
    grid = (pl.cdiv(n_rows, tile_rows),)

    row_spec = pl.BlockSpec((tile_rows, col_block), lambda i: (i, 0))
    src_spec = (pl.BlockSpec((1, col_block), lambda i: (0, 0))
                if src_rows == 1 else row_spec)

    # 3 streams x 2 pipeline buffers; only raise the scoped-VMEM limit when the
    # rows are pathologically wide (otherwise stay at the per-gen default).
    needed = 6 * tile_rows * per_row + (2 << 20)
    compiler_kwargs = {}
    if needed > (12 << 20):
        compiler_kwargs["vmem_limit_bytes"] = int(min(needed, 100 << 20))

    return pl.pallas_call(
        _make_select_kernel(idim, col_block, period),
        out_shape=jax.ShapeDtypeStruct((n_rows, full_width), base2d.dtype),
        grid_spec=pltpu.PrefetchScalarGridSpec(
            num_scalar_prefetch=0,
            grid=grid,
            in_specs=[row_spec, src_spec],
            out_specs=row_spec,
        ),
        # Output aliases base: columns >= col_block are never read nor written
        # and keep base's values.  Copy-free when the caller donates base.
        input_output_aliases={0: 0},
        compiler_params=pltpu.CompilerParams(
            dimension_semantics=("parallel",),
            **compiler_kwargs,
        ),
        cost_estimate=pl.CostEstimate(
            flops=0,
            transcendentals=0,
            bytes_accessed=(2 * n_rows + min(src_rows, n_rows)) * per_row,
        ),
    )(base2d, src2d)


def skip_intervention(base, source, interchange_dim=None, subspaces=None):
    """Pallas implementation of SkipIntervention.forward (subspaces=None path)."""
    # TODO(synk): the subspaces / subspace_partition fancy-index path
    # (data-dependent per-example column gather) is not lowered to Pallas.
    assert subspaces is None

    hidden = int(base.shape[-1])
    idim = hidden if interchange_dim is None else int(interchange_dim)

    if source.dtype != base.dtype:
        source = source.astype(base.dtype)

    # ---- fast paths: no kernel, no extra HBM traffic -------------------------
    if idim <= 0:
        return base
    if idim >= hidden:
        # Constructor default (interchange_dim == embed_dim): full swap.
        if source.shape != base.shape:
            source = jnp.broadcast_to(source, base.shape)
        return source

    orig_shape = base.shape
    total = math.prod(orig_shape)
    rows = total // hidden
    itemsize = jnp.dtype(base.dtype).itemsize

    # Constant / single-vector source (pyvene source_representation): keep it as
    # one row and let the BlockSpec re-read it every step (no HBM broadcast).
    single_source = (source.shape != base.shape
                     and source.shape[-1] == hidden
                     and math.prod(source.shape) == hidden)
    if source.shape != base.shape and not single_source:
        # TODO(synk): general broadcast patterns are materialized here; the
        # common pyvene paths (equal shapes / single constant vector) avoid it.
        source = jnp.broadcast_to(source, base.shape)

    # ---- small-tensor escape hatch: fused XLA select beats a kernel launch ---
    if total * itemsize < _SMALL_FALLBACK_BYTES:
        mask = jnp.arange(hidden) < idim
        return jnp.where(mask, source, base)      # broadcasts source as needed

    if hidden % 128 == 0:
        # Lane-dense hidden: stream only the first ceil(idim/128)*128 columns.
        idim_pad = min(-(-idim // 128) * 128, hidden)
        base2d = base.reshape(rows, hidden)
        src2d = (source.reshape(1, hidden) if single_source
                 else source.reshape(rows, hidden))
        out2d = _run_select(base2d, src2d, idim=idim,
                            col_block=idim_pad, period=None)
        return out2d.reshape(orig_shape)

    # Lane-narrow hidden: fold `fold` logical rows into one lane row so the
    # kernel's last dim is a multiple of 128 (unmasked stores).  Ragged row
    # counts are padded up (at most fold-1 extra rows), never lane-narrow.
    fold = 128 // math.gcd(hidden, 128)
    width = hidden * fold
    pad_rows = (-rows) % fold

    base_r = base.reshape(rows, hidden)
    if pad_rows:
        base_r = jnp.pad(base_r, ((0, pad_rows), (0, 0)))
    n_rows = (rows + pad_rows) // fold
    base2d = base_r.reshape(n_rows, width)

    if single_source:
        src2d = jnp.tile(source.reshape(1, hidden), (1, fold))   # (1, width)
    else:
        src_r = source.reshape(rows, hidden)
        if pad_rows:
            src_r = jnp.pad(src_r, ((0, pad_rows), (0, 0)))
        src2d = src_r.reshape(n_rows, width)

    out2d = _run_select(base2d, src2d, idim=idim, col_block=width, period=hidden)
    out = out2d.reshape(rows + pad_rows, hidden)
    if pad_rows:
        out = out[:rows]
    return out.reshape(orig_shape)


if __name__ == "__main__":
    key = jax.random.PRNGKey(0)
    kb, ks = jax.random.split(key)

    # 1) Default interchange_dim == embed_dim -> full-swap fast path (no kernel).
    base = jax.random.normal(kb, (2, 8, 32), dtype=jnp.float32)
    source = jax.random.normal(ks, (2, 8, 32), dtype=jnp.float32)
    out = jax.block_until_ready(skip_intervention(base, source, interchange_dim=32))
    assert jnp.array_equal(out, source), "full-swap mismatch"

    # 2) Tiny tensor -> jnp escape hatch (kernel launch would lose here).
    ref = base.at[..., :20].set(source[..., :20])
    out = jax.block_until_ready(skip_intervention(base, source, interchange_dim=20))
    assert jnp.array_equal(out, ref), "small-tensor path mismatch"

    # 3) Lane-dense hidden (multiple of 128): narrowed-column + aliased-output kernel.
    b3 = jax.random.normal(kb, (4, 128, 256), dtype=jnp.float32)
    s3 = jax.random.normal(ks, (4, 128, 256), dtype=jnp.float32)
    idim = 100
    ref3 = b3.at[..., :idim].set(s3[..., :idim])
    out3 = jax.block_until_ready(skip_intervention(b3, s3, interchange_dim=idim))
    assert jnp.array_equal(out3, ref3), "narrowed-column kernel mismatch"

    # 3b) Same, bf16 (packed-sublane tile_rows path).
    b4 = b3.astype(jnp.bfloat16)
    s4 = s3.astype(jnp.bfloat16)
    ref4 = b4.at[..., :idim].set(s4[..., :idim])
    out4 = jax.block_until_ready(skip_intervention(b4, s4, interchange_dim=idim))
    assert jnp.array_equal(out4, ref4), "bf16 mismatch"

    # 4) Lane-narrow hidden (32): folded lane-dense kernel, rows divisible by fold.
    b5 = jax.random.normal(kb, (2, 1024, 32), dtype=jnp.float32)
    s5 = jax.random.normal(ks, (2, 1024, 32), dtype=jnp.float32)
    ref5 = b5.at[..., :20].set(s5[..., :20])
    out5 = jax.block_until_ready(skip_intervention(b5, s5, interchange_dim=20))
    assert jnp.array_equal(out5, ref5), "folded kernel mismatch"

    # 5) Ragged row count (rows % fold != 0): padded up, still lane-dense stores.
    b6 = jax.random.normal(kb, (3, 683, 32), dtype=jnp.float32)
    s6 = jax.random.normal(ks, (3, 683, 32), dtype=jnp.float32)
    ref6 = b6.at[..., :10].set(s6[..., :10])
    out6 = jax.block_until_ready(skip_intervention(b6, s6, interchange_dim=10))
    assert jnp.array_equal(out6, ref6), "ragged padded kernel mismatch"

    # 6) Constant single-vector source (source_representation): 1-row block,
    #    no HBM broadcast materialization.
    sv = jax.random.normal(ks, (256,), dtype=jnp.float32)
    ref7 = b3.at[..., :idim].set(sv[:idim])
    out7 = jax.block_until_ready(skip_intervention(b3, sv, interchange_dim=idim))
    assert jnp.array_equal(out7, ref7), "constant-source mismatch"

    print("KERNEL_OK")
</pallas_src>

<mosaic_0001>
module attributes {stable_mosaic.version = 11 : i64} {
  func.func @kernel(%arg0: i32, %arg1: memref<64x128xf32, #tpu.memory_space<vmem>>, %arg2: memref<64x128xf32, #tpu.memory_space<vmem>>, %arg3: memref<64x128xf32, #tpu.memory_space<vmem>>) attributes {dimension_semantics = [#tpu.dimension_semantics<parallel>], iteration_bounds = array<i64: 8>, scalar_prefetch = 0 : i64, scratch_operands = 0 : i64, tpu.core_type = #tpu.core_type<tc>, window_params = [{transform_indices = @transform_0, window_bounds = array<i64: 64, 128>}, {transform_indices = @transform_1, window_bounds = array<i64: 64, 128>}, {transform_indices = @transform_2, window_bounds = array<i64: 64, 128>}]} {
    %0 = tpu.iota {dimensions = array<i32: 1>} : vector<1x128xi32>
    %c100_i32 = arith.constant 100 : i32
    %1 = vector.broadcast %c100_i32 : i32 to vector<1x128xi32>
    %2 = arith.cmpi slt, %0, %1 : vector<1x128xi32>
    %c0 = arith.constant 0 : index
    %c0_0 = arith.constant 0 : index
    %3 = vector.load %arg2[%c0, %c0_0] : memref<64x128xf32, #tpu.memory_space<vmem>>, vector<64x128xf32>
    %c0_1 = arith.constant 0 : index
    %c0_2 = arith.constant 0 : index
    %4 = vector.load %arg1[%c0_1, %c0_2] : memref<64x128xf32, #tpu.memory_space<vmem>>, vector<64x128xf32>
    %5 = vector.shape_cast %2 : vector<1x128xi1> to vector<1x128xi1>
    %6 = vector.broadcast %5 : vector<1x128xi1> to vector<64x128xi1>
    %7 = arith.select %6, %3, %4 : vector<64x128xi1>, vector<64x128xf32>
    %c0_3 = arith.constant 0 : index
    %c0_4 = arith.constant 0 : index
    %8 = vector.load %arg3[%c0_3, %c0_4] : memref<64x128xf32, #tpu.memory_space<vmem>>, vector<64x128xf32>
    tpu.vector_store %arg3[%c0_3, %c0_4], %7 {strides = array<i32>} : memref<64x128xf32, #tpu.memory_space<vmem>>, vector<64x128xf32>,
    return
  }
  func.func @transform_0(%arg0: i32) -> (i32, i32) {
    %c0_i32 = arith.constant 0 : i32
    %c0_i32_0 = arith.constant 0 : i32
    return %arg0, %c0_i32 : i32, i32
  }
  func.func @transform_1(%arg0: i32) -> (i32, i32) {
    %c0_i32 = arith.constant 0 : i32
    %c0_i32_0 = arith.constant 0 : i32
    return %arg0, %c0_i32 : i32, i32
  }
  func.func @transform_2(%arg0: i32) -> (i32, i32) {
    %c0_i32 = arith.constant 0 : i32
    %c0_i32_0 = arith.constant 0 : i32
    return %arg0, %c0_i32 : i32, i32
  }
}

</mosaic_0001>

<llo_original>
// kernel: tpu_custom_call.1
$region0: #{tpu_custom_call.1}
  #allocation0 [shape = 'u32[]', space=smem, size = 0x4, offset = 0x4, fixed_abs, tag = 'smem constant byte address 0x4 - core index']
  #allocation1 [shape = 'u32[72,128]{1,0:T(1,128)}', space=vmem, size = 0x9000, scoped, tag = 'internal scratch']
  %s0 = inlined_call_operand.hbm [shape: f32[512,256], index: 0, kind: input, shape index: {}, may-alias: {0,2}]
  %s1 = inlined_call_operand.vmem [shape: f32[512,256], index: 1, kind: input, shape index: {}]
  %s2 = inlined_call_operand.hbm [shape: f32[512,256], index: 2, kind: output, shape index: {}, may-alias: {0,2}]
  %s3 = sld [smem:[#allocation0]]
  $region83: #{tpu_custom_call.1} parent=0
    _
  %s5 = ssub.s32 1, %s3
  %s6 = scalar_select 0, %s5, %s3
  $region1: #{tpu_custom_call.1} parent=0
    #allocation2 [shape = 'u8[65536]{0}', space=vmem, size = 0x10000, scoped, tag = 'input window, operand 0']
    #allocation3 [shape = 's32[2]{0}', space=sflag, size = 0x8, scoped, tag = 'scoped memory for tpu_custom_call.1']
    #allocation4 [shape = 's32[2]{0}', space=sflag, size = 0x8, scoped, tag = 'scoped memory for tpu_custom_call.1']
    #allocation5 [shape = 'u8[65536]{0}', space=vmem, size = 0x10000, scoped, tag = 'input window, operand 1']
    #allocation6 [shape = 'u8[65536]{0}', space=vmem, size = 0x10000, scoped, tag = 'output window, operand 0']
    %7 = vsyncpa [#allocation3], 0
    %s8 = scalar_lea.sflag [#allocation3], 1
    %9 = vsyncpa %s8, 0
    %10 = vsyncpa [#allocation4], 0
    %s11 = scalar_lea.sflag [#allocation4], 1
    %12 = vsyncpa %s11, 0
    loop: start=0, step=1, limit=10
    $region2: #{tpu_custom_call.1} parent=1 // loop_pre_header
      _
    $region3: #{tpu_custom_call.1} parent=1 // loop_header
      %s14 = sphi 0, %s18
      %p15 = scmp.ge.s32.totalorder %s14, 10
      %s24 = sphi 0, %s26
      %s27 = sphi 0, %s24
      %s28 = sphi 0, %s27
      %s44 = sphi 0, %s28
      %s50 = sphi 0, %s52
      %s53 = sphi 0, %s50
      %s54 = sphi 0, %s53
      %s70 = sphi 0, %s54
      %s76 = sphi 0, %s78
      %s79 = sphi 0, %s76
      %s80 = sphi 0, %s79
      %s96 = sphi 0, %s80
    $region4: #{tpu_custom_call.1} parent=1 // loop_header_branch
      %17 = sbr.rel (%p15) target = $region8
    $region5: #{tpu_custom_call.1} parent=1 // loop_body
      %s19 = ssub.s32 %s14, 1
      %s20 = ssub.s32 %s14, 2
      %s21 = sadd.s32 %s14, 1
      %s22 = ssub.s32 %s14, %s21
      %p23 = scmp.eq.s32.totalorder %s22, 0
      %s25 = sadd.s32 %s24, 1
      %s26 = scalar_select %p23, %s24, %s25
      %p29 = pneg %p23
      %p30 = scmp.eq.s32.totalorder %s14, 7
      %p31 = por %p29, %p30
      %p32 = scmp.ne.s32.totalorder %s24, %s27
      %p33 = scmp.eq.s32.totalorder %s14, 0
      %p34 = por %p32, %p33
      %p35 = scmp.ne.s32.totalorder %s24, %s27
      %p36 = scmp.eq.s32.totalorder %s19, 7
      %p37 = por %p35, %p36
      %p38 = scmp.ne.s32.totalorder %s27, %s28
      %p39 = scmp.eq.s32.totalorder %s19, 0
      %p40 = por %p38, %p39
      %p41 = scmp.ne.s32.totalorder %s27, %s28
      %p42 = scmp.eq.s32.totalorder %s20, 7
      %p43 = por %p41, %p42
      %p45 = scmp.ne.s32.totalorder %s28, %s44
      %p46 = scmp.eq.s32.totalorder %s20, 0
      %p47 = por %p45, %p46
      %s48 = ssub.s32 %s14, %s21
      %p49 = scmp.eq.s32.totalorder %s48, 0
      %s51 = sadd.s32 %s50, 1
      %s52 = scalar_select %p49, %s50, %s51
      %p55 = pneg %p49
      %p56 = scmp.eq.s32.totalorder %s14, 7
      %p57 = por %p55, %p56
      %p58 = scmp.ne.s32.totalorder %s50, %s53
      %p59 = scmp.eq.s32.totalorder %s14, 0
      %p60 = por %p58, %p59
      %p61 = scmp.ne.s32.totalorder %s50, %s53
      %p62 = scmp.eq.s32.totalorder %s19, 7
      %p63 = por %p61, %p62
      %p64 = scmp.ne.s32.totalorder %s53, %s54
      %p65 = scmp.eq.s32.totalorder %s19, 0
      %p66 = por %p64, %p65
      %p67 = scmp.ne.s32.totalorder %s53, %s54
      %p68 = scmp.eq.s32.totalorder %s20, 7
      %p69 = por %p67, %p68
      %p71 = scmp.ne.s32.totalorder %s54, %s70
      %p72 = scmp.eq.s32.totalorder %s20, 0
      %p73 = por %p71, %p72
      %s74 = ssub.s32 %s14, %s21
      %p75 = scmp.eq.s32.totalorder %s74, 0
      %s77 = sadd.s32 %s76, 1
      %s78 = scalar_select %p75, %s76, %s77
      %p81 = pneg %p75
      %p82 = scmp.eq.s32.totalorder %s14, 7
      %p83 = por %p81, %p82
      %p84 = scmp.ne.s32.totalorder %s76, %s79
      %p85 = scmp.eq.s32.totalorder %s14, 0
      %p86 = por %p84, %p85
      %p87 = scmp.ne.s32.totalorder %s76, %s79
      %p88 = scmp.eq.s32.totalorder %s19, 7
      %p89 = por %p87, %p88
      %p90 = scmp.ne.s32.totalorder %s79, %s80
      %p91 = scmp.eq.s32.totalorder %s19, 0
      %p92 = por %p90, %p91
      %p93 = scmp.ne.s32.totalorder %s79, %s80
      %p94 = scmp.eq.s32.totalorder %s20, 7
      %p95 = por %p93, %p94
      %p97 = scmp.ne.s32.totalorder %s80, %s96
      %p98 = scmp.eq.s32.totalorder %s20, 0
      %p99 = por %p97, %p98
      %p100 = scmp.le.s32.totalorder 1, %s14
      %p101 = scmp.lt.s32.totalorder %s14, 9
      %p102 = pnand %p100, %p101
      %p103 = pneg %p102
      // Predicated region
      $region9: #{tpu_custom_call.1} parent=5 // pred_check
        _
      $region10: #{tpu_custom_call.1} parent=5 // pred_check_branch
        %105 = sbr.rel (%p102) target = $region12
      $region11: #{tpu_custom_call.1} parent=5 // pred_region
        %s106 = ssub.s32 %s14, 1
      $region12: #{tpu_custom_call.1} parent=5 // pred_fallthru
        _
      %p107 = scmp.lt.s32.totalorder %s14, 8
      // Predicated region
      $region13: #{tpu_custom_call.1} parent=5 // pred_check
        %p108 = pneg %p107
      $region14: #{tpu_custom_call.1} parent=5 // pred_check_branch
        %110 = sbr.rel (%p108) target = $region16
      $region15: #{tpu_custom_call.1} parent=5 // pred_region
        // Predicated region
        $region17: #{tpu_custom_call.1} parent=15 // pred_check
          %p111 = pneg %p34
        $region18: #{tpu_custom_call.1} parent=15 // pred_check_branch
          %113 = sbr.rel (%p111) target = $region20
        $region19: #{tpu_custom_call.1} parent=15 // pred_region
          %s114 = sand.u32 %s24, 1
          %s115 = scalar_lea.sflag [#allocation3], %s114
          %s116 = sand.u32 %s24, 1
          %s117 = smul.addr %s116, 64
          %s118 = scalar_lea.vmem [#allocation2], %s117
          %s119 = smul.u32 8, %s14
          %121 = vsyncadd %s115, 0
          %s122 = smul.addr %s119, 2
          %s123 = smul.addr %s122, 8
          %s124 = scalar_lea.hbm %s0, %s123
          %s125 = sshll.u32 %s124, 4
          %s126 = int_to_ptr.hbm [resolvable:$true] %s125
          %s127 = sshll.u32 %s118, 4
          %s128 = int_to_ptr.vmem [resolvable:$true] %s127
          %133 = dma.hbm_to_vmem [thread:$0]  %s126, 1024, %s128, %s115, 256, 128, 8
        $region20: #{tpu_custom_call.1} parent=15 // pred_fallthru
          _
        // Predicated region
        $region21: #{tpu_custom_call.1} parent=15 // pred_check
          %p134 = pneg %p60
        $region22: #{tpu_custom_call.1} parent=15 // pred_check_branch
          %136 = sbr.rel (%p134) target = $region24
        $region23: #{tpu_custom_call.1} parent=15 // pred_region
          %s137 = sand.u32 %s50, 1
          %s138 = sand.u32 %s50, 1
          %s139 = smul.addr %s138, 64
          %s140 = scalar_lea.vmem [#allocation5], %s139
          %s141 = smul.u32 8, %s14
          %s142 = smul.addr %s141, 2
          %s143 = smul.addr %s142, 8
          %s144 = scalar_lea.vmem %s1, %s143
          // Predicated region
          $region25: #{tpu_custom_call.1} parent=23 // pred_check
            _
          $region26: #{tpu_custom_call.1} parent=23 // pred_check_branch
            %146 = sbr.rel (0) target = $region28
          $region27: #{tpu_custom_call.1} parent=23 // pred_region
            // Predicated region
            $region29: #{tpu_custom_call.1} parent=27 // pred_check
              _
            $region30: #{tpu_custom_call.1} parent=27 // pred_check_branch
              %148 = sbr.rel (0) target = $region32
            $region31: #{tpu_custom_call.1} parent=27 // pred_region
              // Predicated region
              $region44: #{tpu_custom_call.1} parent=31 // pred_check
                _
              $region45: #{tpu_custom_call.1} parent=31 // pred_check_branch
                %178 = sbr.rel (0) target = $region47
              $region46: #{tpu_custom_call.1} parent=31 // pred_region
                loop: start=0, step=1, limit=1
                $region48: #{tpu_custom_call.1} parent=46 // loop_pre_header
                  _
                $region49: #{tpu_custom_call.1} parent=46 // loop_header
                  %s180 = sphi 0, %s184
                  %p181 = scmp.ge.s32.totalorder %s180, 1
                  %s185 = sphi %s144, %s144
                  %s186 = sphi %s140, %s140
                $region50: #{tpu_custom_call.1} parent=46 // loop_header_branch
                  %183 = sbr.rel (%p181) target = $region54
                $region51: #{tpu_custom_call.1} parent=46 // loop_body
                  %v187 = vld [vmem:[%s185] sm:$0xff]
                  %188 = vst [vmem:[%s186] sm:$0xff] %v187
                  %v189 = vld [vmem:[%s185 + $0x10] sm:$0xff]
                  %190 = vst [vmem:[%s186 + $0x8] sm:$0xff] %v189
                  %v191 = vld [vmem:[%s185 + $0x20] sm:$0xff]
                  %192 = vst [vmem:[%s186 + $0x10] sm:$0xff] %v191
                  %v193 = vld [vmem:[%s185 + $0x30] sm:$0xff]
                  %194 = vst [vmem:[%s186 + $0x18] sm:$0xff] %v193
                  %v195 = vld [vmem:[%s185 + $0x40] sm:$0xff]
                  %196 = vst [vmem:[%s186 + $0x20] sm:$0xff] %v195
                  %v197 = vld [vmem:[%s185 + $0x50] sm:$0xff]
                  %198 = vst [vmem:[%s186 + $0x28] sm:$0xff] %v197
                  %v199 = vld [vmem:[%s185 + $0x60] sm:$0xff]
                  %200 = vst [vmem:[%s186 + $0x30] sm:$0xff] %v199
                  %v201 = vld [vmem:[%s185 + $0x70] sm:$0xff]
                  %202 = vst [vmem:[%s186 + $0x38] sm:$0xff] %v201
                $region52: #{tpu_custom_call.1} parent=46 // loop_footer
                  %s184 = sadd.s32 1, %s180
                $region53: #{tpu_custom_call.1} parent=46 // loop_footer_branch
                  %179 = sbr.rel target = $region49
                $region54: #{tpu_custom_call.1} parent=46 // loop_exit
                  _
              $region47: #{tpu_custom_call.1} parent=31 // pred_fallthru
                _
              // Predicated region
              $region55: #{tpu_custom_call.1} parent=31 // pred_check
                _
              $region56: #{tpu_custom_call.1} parent=31 // pred_check_branch
                %204 = sbr.rel target = $region58
              $region57: #{tpu_custom_call.1} parent=31 // pred_region
                _
              $region58: #{tpu_custom_call.1} parent=31 // pred_fallthru
                _
            $region32: #{tpu_custom_call.1} parent=27 // pred_fallthru
              _
            // Predicated region
            $region33: #{tpu_custom_call.1} parent=27 // pred_check
              _
            $region34: #{tpu_custom_call.1} parent=27 // pred_check_branch
              %150 = sbr.rel target = $region36
            $region35: #{tpu_custom_call.1} parent=27 // pred_region
              %s152 = ssub.s32 256, 1
              loop: start=0, step=1, limit=1
              $region37: #{tpu_custom_call.1} parent=35 // loop_pre_header
                _
              $region38: #{tpu_custom_call.1} parent=35 // loop_header
                %s154 = sphi 0, %s158
                %p155 = scmp.ge.s32.totalorder %s154, 1
                %s159 = sphi %s144, %s144
                %s160 = sphi %s140, %s140
              $region39: #{tpu_custom_call.1} parent=35 // loop_header_branch
                %157 = sbr.rel (%p155) target = $region43
              $region40: #{tpu_custom_call.1} parent=35 // loop_body
                %v161 = vld [vmem:[%s159] sm:%s152]
                %162 = vst [vmem:[%s160] sm:%s152] %v161
                %v163 = vld [vmem:[%s159 + $0x10] sm:%s152]
                %164 = vst [vmem:[%s160 + $0x8] sm:%s152] %v163
                %v165 = vld [vmem:[%s159 + $0x20] sm:%s152]
                %166 = vst [vmem:[%s160 + $0x10] sm:%s152] %v165
                %v167 = vld [vmem:[%s159 + $0x30] sm:%s152]
                %168 = vst [vmem:[%s160 + $0x18] sm:%s152] %v167
                %v169 = vld [vmem:[%s159 + $0x40] sm:%s152]
                %170 = vst [vmem:[%s160 + $0x20] sm:%s152] %v169
                %v171 = vld [vmem:[%s159 + $0x50] sm:%s152]
                %172 = vst [vmem:[%s160 + $0x28] sm:%s152] %v171
                %v173 = vld [vmem:[%s159 + $0x60] sm:%s152]
                %174 = vst [vmem:[%s160 + $0x30] sm:%s152] %v173
                %v175 = vld [vmem:[%s159 + $0x70] sm:%s152]
                %176 = vst [vmem:[%s160 + $0x38] sm:%s152] %v175
              $region41: #{tpu_custom_call.1} parent=35 // loop_footer
                %s158 = sadd.s32 1, %s154
              $region42: #{tpu_custom_call.1} parent=35 // loop_footer_branch
                %153 = sbr.rel target = $region38
              $region43: #{tpu_custom_call.1} parent=35 // loop_exit
                _
            $region36: #{tpu_custom_call.1} parent=27 // pred_fallthru
              _
          $region28: #{tpu_custom_call.1} parent=23 // pred_fallthru
            _
          %205 = vnop
        $region24: #{tpu_custom_call.1} parent=15 // pred_fallthru
          _
      $region16: #{tpu_custom_call.1} parent=5 // pred_fallthru
        _
      %p206 = scmp.le.s32.totalorder 1, %s14
      %p207 = scmp.lt.s32.totalorder %s14, 9
      %p208 = pnand %p206, %p207
      %p209 = pneg %p208
      // Predicated region
      $region59: #{tpu_custom_call.1} parent=5 // pred_check
        _
      $region60: #{tpu_custom_call.1} parent=5 // pred_check_branch
        %211 = sbr.rel (%p208) target = $region62
      $region61: #{tpu_custom_call.1} parent=5 // pred_region
        %s212 = ssub.s32 %s14, 1
        %s213 = sand.u32 %s27, 1
        %s214 = scalar_lea.sflag [#allocation3], %s213
        %s215 = sand.u32 %s27, 1
        %s216 = smul.addr %s215, 64
        %s217 = scalar_lea.vmem [#allocation2], %s216
        // Predicated region
        $region63: #{tpu_custom_call.1} parent=61 // pred_check
          %p218 = pneg %p40
        $region64: #{tpu_custom_call.1} parent=61 // pred_check_branch
          %220 = sbr.rel (%p218) target = $region66
        $region65: #{tpu_custom_call.1} parent=61 // pred_region
          %222 = dma.done %s214, 1024
        $region66: #{tpu_custom_call.1} parent=61 // pred_fallthru
          _
        %s223 = sand.u32 %s53, 1
        %s224 = sand.u32 %s53, 1
        %s225 = smul.addr %s224, 64
        %s226 = scalar_lea.vmem [#allocation5], %s225
        // Predicated region
        $region67: #{tpu_custom_call.1} parent=61 // pred_check
          %p227 = pneg %p66
        $region68: #{tpu_custom_call.1} parent=61 // pred_check_branch
          %229 = sbr.rel (%p227) target = $region70
        $region69: #{tpu_custom_call.1} parent=61 // pred_region
          _
        $region70: #{tpu_custom_call.1} parent=61 // pred_fallthru
          _
        %s230 = sand.u32 %s27, 1
        %s231 = scalar_lea.sflag [#allocation3], %s230
        %s232 = sand.u32 %s27, 1
        %s233 = smul.addr %s232, 64
        %s234 = scalar_lea.vmem [#allocation2], %s233
        %p235 = pneg %p40
        %p236 = pneg %p37
        %s237 = sand.u32 %s53, 1
        %s238 = sand.u32 %s53, 1
        %s239 = smul.addr %s238, 64
        %s240 = scalar_lea.vmem [#allocation5], %s239
        %p241 = pneg %p66
        %p242 = pneg %p63
        %p243 = pneg %p92
        %p244 = pneg %p89
        %s245 = sand.u32 %s79, 1
        %s246 = scalar_lea.sflag [#allocation4], %s245
        %s247 = sand.u32 %s79, 1
        %s248 = smul.addr %s247, 64
        %s249 = scalar_lea.vmem [#allocation6], %s248
        %s250 = smul.u32 8, %s19
        %s251 = smul.u32 8, %s19
        %s252 = smul.u32 8, %s19
        %v253 = vlaneseq
        %v254 = vand.u32 %v253, 127
        %vm255 = vcmp.lt.s32.totalorder %v254, 100
        %v256 = vld [vmem:[%s226] sm:$0xff]
        %v257 = vld [vmem:[%s226 + $0x8] sm:$0xff]
        %v258 = vld [vmem:[%s226 + $0x10] sm:$0xff]
        %v259 = vld [vmem:[%s226 + $0x18] sm:$0xff]
        %v260 = vld [vmem:[%s226 + $0x20] sm:$0xff]
        %v261 = vld [vmem:[%s226 + $0x28] sm:$0xff]
        %v262 = vld [vmem:[%s226 + $0x30] sm:$0xff]
        %v263 = vld [vmem:[%s226 + $0x38] sm:$0xff]
        %v264 = vld [vmem:[%s217] sm:$0xff]
        %v265 = vld [vmem:[%s217 + $0x8] sm:$0xff]
        %v266 = vld [vmem:[%s217 + $0x10] sm:$0xff]
        %v267 = vld [vmem:[%s217 + $0x18] sm:$0xff]
        %v268 = vld [vmem:[%s217 + $0x20] sm:$0xff]
        %v269 = vld [vmem:[%s217 + $0x28] sm:$0xff]
        %v270 = vld [vmem:[%s217 + $0x30] sm:$0xff]
        %v271 = vld [vmem:[%s217 + $0x38] sm:$0xff]
        %v272 = vsel %vm255, 1, 0
        %vm273 = vcmp.eq.s32.totalorder %v272, 1
        %v274 = vsel %vm273, %v256, %v264
        %v275 = vsel %vm273, %v257, %v265
        %v276 = vsel %vm273, %v258, %v266
        %v277 = vsel %vm273, %v259, %v267
        %v278 = vsel %vm273, %v260, %v268
        %v279 = vsel %vm273, %v261, %v269
        %v280 = vsel %vm273, %v262, %v270
        %v281 = vsel %vm273, %v263, %v271
        %282 = vst [vmem:[%s249] sm:$0xff] %v274
        %283 = vst [vmem:[%s249 + $0x8] sm:$0xff] %v275
        %284 = vst [vmem:[%s249 + $0x10] sm:$0xff] %v276
        %285 = vst [vmem:[%s249 + $0x18] sm:$0xff] %v277
        %286 = vst [vmem:[%s249 + $0x20] sm:$0xff] %v278
        %287 = vst [vmem:[%s249 + $0x28] sm:$0xff] %v279
        %288 = vst [vmem:[%s249 + $0x30] sm:$0xff] %v280
        %289 = vst [vmem:[%s249 + $0x38] sm:$0xff] %v281
        %s290 = sand.u32 %s79, 1
        %s291 = scalar_lea.sflag [#allocation4], %s290
        %s292 = sand.u32 %s79, 1
        %s293 = smul.addr %s292, 64
        %s294 = scalar_lea.vmem [#allocation6], %s293
        // Predicated region
        $region71: #{tpu_custom_call.1} parent=61 // pred_check
          %p295 = pneg %p89
        $region72: #{tpu_custom_call.1} parent=61 // pred_check_branch
          %297 = sbr.rel (%p295) target = $region74
        $region73: #{tpu_custom_call.1} parent=61 // pred_region
          %s298 = smul.u32 8, %s19
          %300 = vsyncadd %s291, 0
          %s301 = smul.addr %s298, 2
          %s302 = smul.addr %s301, 8
          %s303 = scalar_lea.hbm %s2, %s302
          %s304 = sshll.u32 %s294, 4
          %s305 = int_to_ptr.vmem [resolvable:$true] %s304
          %s306 = sshll.u32 %s303, 4
          %s307 = int_to_ptr.hbm [resolvable:$true] %s306
          %312 = dma.vmem_to_hbm [thread:$0]  %s305, 1024, %s307, %s291, 128, 256, 8
        $region74: #{tpu_custom_call.1} parent=61 // pred_fallthru
          _
      $region62: #{tpu_custom_call.1} parent=5 // pred_fallthru
        _
      %p313 = scmp.le.s32.totalorder 2, %s14
      // Predicated region
      $region75: #{tpu_custom_call.1} parent=5 // pred_check
        %p314 = pneg %p313
      $region76: #{tpu_custom_call.1} parent=5 // pred_check_branch
        %316 = sbr.rel (%p314) target = $region78
      $region77: #{tpu_custom_call.1} parent=5 // pred_region
        %s317 = ssub.s32 %s14, 2
        // Predicated region
        $region79: #{tpu_custom_call.1} parent=77 // pred_check
          %p318 = pneg %p95
        $region80: #{tpu_custom_call.1} parent=77 // pred_check_branch
          %320 = sbr.rel (%p318) target = $region82
        $region81: #{tpu_custom_call.1} parent=77 // pred_region
          %s321 = sand.u32 %s80, 1
          %s322 = scalar_lea.sflag [#allocation4], %s321
          %s323 = sand.u32 %s80, 1
          %s324 = smul.addr %s323, 64
          %s325 = scalar_lea.vmem [#allocation6], %s324
          %327 = dma.done %s322, 1024
        $region82: #{tpu_custom_call.1} parent=77 // pred_fallthru
          _
      $region78: #{tpu_custom_call.1} parent=5 // pred_fallthru
        _
    $region6: #{tpu_custom_call.1} parent=1 // loop_footer
      %s18 = sadd.s32 1, %s14
    $region7: #{tpu_custom_call.1} parent=1 // loop_footer_branch
      %13 = sbr.rel target = $region3
    $region8: #{tpu_custom_call.1} parent=1 // loop_exit
      _
    %328 = vsyncpa [#allocation3], 1
    %s329 = scalar_lea.sflag [#allocation3], 1
    %330 = vsyncpa %s329, 1
    %331 = vsyncpa [#allocation4], 1
    %s332 = scalar_lea.sflag [#allocation4], 1
    %333 = vsyncpa %s332, 1

</llo_original>
